<compile_context>
chip_gen: v5e
topology: v5e:2x2
jax: 0.10.0
libtpu: 0.0.40
codegen_flags: <defaults>
</compile_context>

<pallas_src>
import functools

import jax
import jax.numpy as jnp
from jax import lax
from jax.experimental import pallas as pl
from jax.experimental.pallas import tpu as pltpu

_MIB = 1024 * 1024


# --------------------------------------------------------------------------
# Tiling helpers
# --------------------------------------------------------------------------
def _vmem_limit_bytes():
    """Per-generation scoped-VMEM cap: ~75% of physical, clamped to [32,96] MiB."""
    try:
        cap = int(pltpu.get_tpu_info().vmem_capacity_bytes)
    except Exception:
        cap = 64 * _MIB  # conservative (v7x physical VMEM per TensorCore)
    return max(32 * _MIB, min(cap * 3 // 4, 96 * _MIB))


def _largest_divisor_at_most(n, cap):
    cap = max(1, min(n, cap))
    for d in range(cap, 0, -1):
        if n % d == 0:
            return d
    return 1


def _pick_c_tile(C, itemsize):
    """Dtype-aware channel tile (sublane axis). Prefers an exact divisor of C,
    capped near C/2 so the stats pass keeps >=2 parallel c-blocks (v7x megacore)."""
    sub = {4: 8, 2: 16, 1: 32}.get(itemsize, 8)
    if C <= sub:
        return C  # full-dim block is always legal
    cap = 256
    if C >= 2 * sub:
        cap = min(cap, max(sub, ((C // 2) // sub) * sub))
    t_max = max(sub, (min(C, cap) // sub) * sub)
    t = t_max
    while t >= sub:
        if C % t == 0:
            return t
        t -= sub
    # No exact divisor that is a multiple of `sub`: use a cdiv grid with a
    # padded tail block (per-channel stats of pad rows are discarded on write).
    return t_max


# --------------------------------------------------------------------------
# Kernels
# --------------------------------------------------------------------------
def _stats_kernel(x_ref, sum_ref, ssq_ref, *, hw, hw_tile, mask_hw):
    """Per-channel sum / sum-of-squares, accumulated across the (N, HW) grid axes.

    x_ref:   (n_tile, c_tile, hw_tile) input dtype
    sum_ref: (c_tile, 1) f32 resident accumulator (sublane-oriented: no relayout)
    ssq_ref: (c_tile, 1) f32 resident accumulator
    """
    @pl.when((pl.program_id(1) == 0) & (pl.program_id(2) == 0))
    def _():
        sum_ref[...] = jnp.zeros_like(sum_ref)
        ssq_ref[...] = jnp.zeros_like(ssq_ref)

    x = x_ref[...].astype(jnp.float32)                    # (n_tile, c_tile, hw_tile)
    if mask_hw:
        # Tail HW block: zero out lanes beyond the real spatial extent.
        start = pl.program_id(2) * hw_tile
        lane = lax.broadcasted_iota(jnp.int32, x.shape, 2)
        x = jnp.where(start + lane < hw, x, 0.0)

    # Reduce lanes first (channels stay on sublanes), then the N block dim.
    sum_ref[...] += jnp.sum(jnp.sum(x, axis=2, keepdims=True), axis=0)       # (c_tile, 1)
    ssq_ref[...] += jnp.sum(jnp.sum(x * x, axis=2, keepdims=True), axis=0)   # (c_tile, 1)


def _norm_kernel(x_ref, sum_ref, ssq_ref, g_ref, b_ref, y_ref, *, inv_nhw, eps):
    """y = x * scale + shift with the per-channel affine folded in-kernel.

    x_ref/y_ref: (n_tile, c_tile, hw_tile)
    sum_ref/ssq_ref/g_ref/b_ref: (c_tile, 1) f32 (sublane-oriented -> lane broadcast)
    """
    mean = sum_ref[...] * inv_nhw                                  # (c_tile, 1)
    var = jnp.maximum(ssq_ref[...] * inv_nhw - mean * mean, 0.0)   # biased (correction=0)
    inv_std = lax.rsqrt(var + eps)
    scale = g_ref[...] * inv_std
    shift = b_ref[...] - mean * scale

    x = x_ref[...].astype(jnp.float32)                             # (n_tile, c_tile, hw_tile)
    y_ref[...] = (x * scale[None] + shift[None]).astype(y_ref.dtype)


def _fused_kernel(x_ref, g_ref, b_ref, y_ref, mean_ref, var_ref, *, inv_nhw, eps):
    """Single-pass path: whole x is VMEM-resident (2x|x| HBM traffic).

    x_ref/y_ref: (N, C, HW); g_ref/b_ref/mean_ref/var_ref: (C, 1) f32.
    """
    x = x_ref[...].astype(jnp.float32)                                      # (N, C, HW)
    s = jnp.sum(jnp.sum(x, axis=2, keepdims=True), axis=0, keepdims=True)   # (1, C, 1)
    ssq = jnp.sum(jnp.sum(x * x, axis=2, keepdims=True), axis=0, keepdims=True)
    mean = s * inv_nhw
    var = jnp.maximum(ssq * inv_nhw - mean * mean, 0.0)
    inv_std = lax.rsqrt(var + eps)
    scale = g_ref[...][None] * inv_std                                      # (1, C, 1)
    shift = b_ref[...][None] - mean * scale
    y_ref[...] = (x * scale + shift).astype(y_ref.dtype)
    mean_ref[...] = mean[0]                                                 # (C, 1)
    var_ref[...] = var[0]


# --------------------------------------------------------------------------
# Wrapper
# --------------------------------------------------------------------------
def batchnorm_forward(x, gamma, beta, running_mean, running_var,
                      eps=1e-5, momentum=0.1, force_two_pass=False):
    """Training-mode BatchNorm forward matching the PyTorch module.

    x:            (N, C, H, W)
    gamma, beta:  (1, C, 1, 1)
    running_mean, running_var: (1,) buffers (as in the reference module)
    Returns (y, new_running_mean, new_running_var); y has shape/dtype of x.
    """
    N, C, H, W = x.shape
    HW = H * W
    nhw = N * HW
    inv_nhw = 1.0 / float(nhw)
    eps = float(eps)

    # Free reshape only (no transpose / extra HBM round trip): spatial on lanes,
    # channels on sublanes.
    x3d = x.reshape(N, C, HW)
    g2d = gamma.reshape(C, 1).astype(jnp.float32)
    b2d = beta.reshape(C, 1).astype(jnp.float32)

    vmem_limit = _vmem_limit_bytes()
    itemsize = jnp.dtype(x.dtype).itemsize
    x_f32_bytes = N * C * HW * 4

    if (not force_two_pass) and x_f32_bytes <= vmem_limit // 5:
        # ---------------- single-pass fast path: x resident in VMEM ----------------
        y3d, mean2d, var2d = pl.pallas_call(
            functools.partial(_fused_kernel, inv_nhw=inv_nhw, eps=eps),
            out_shape=(
                jax.ShapeDtypeStruct((N, C, HW), x.dtype),
                jax.ShapeDtypeStruct((C, 1), jnp.float32),
                jax.ShapeDtypeStruct((C, 1), jnp.float32),
            ),
            in_specs=[pl.BlockSpec(memory_space=pltpu.MemorySpace.VMEM)] * 3,
            out_specs=(pl.BlockSpec(memory_space=pltpu.MemorySpace.VMEM),) * 3,
            compiler_params=pltpu.CompilerParams(vmem_limit_bytes=vmem_limit),
        )(x3d, g2d, b2d)
        mean = mean2d.reshape(C)
        var = var2d.reshape(C)
    else:
        # ---------------- two-pass tiled path (HBM-bound; 3x|x| traffic) -----------
        c_tile = _pick_c_tile(C, itemsize)

        # Block sizing: a few MiB per block (generation-aware), lane dim a
        # multiple of 128 (or the full HW), multiple N per step.
        max_block_bytes = max(1 * _MIB, min(8 * _MIB, vmem_limit // 16))
        hw_cap = max(128, (max_block_bytes // (c_tile * itemsize)) // 128 * 128)
        if HW <= hw_cap:
            hw_tile = HW           # full-dim block: always legal, no masking needed
            mask_hw = False
        else:
            hw_tile = hw_cap       # multiple of 128; tail block masked in stats pass
            mask_hw = (HW % hw_tile) != 0
        n_cap = max(1, max_block_bytes // (c_tile * hw_tile * itemsize))
        n_tile = _largest_divisor_at_most(N, n_cap)

        grid = (pl.cdiv(C, c_tile), N // n_tile, pl.cdiv(HW, hw_tile))

        x_spec = pl.BlockSpec((n_tile, c_tile, hw_tile), lambda c, n, h: (n, c, h))
        vec_spec = pl.BlockSpec((c_tile, 1), lambda c, n, h: (c, 0))

        # ----- pass 1: per-channel sum & sum-of-squares (f32 accumulation) -----
        sum_c, ssq_c = pl.pallas_call(
            functools.partial(_stats_kernel, hw=HW, hw_tile=hw_tile, mask_hw=mask_hw),
            out_shape=(
                jax.ShapeDtypeStruct((C, 1), jnp.float32),
                jax.ShapeDtypeStruct((C, 1), jnp.float32),
            ),
            grid_spec=pltpu.PrefetchScalarGridSpec(
                num_scalar_prefetch=0,
                grid=grid,
                in_specs=[x_spec],
                out_specs=(vec_spec, vec_spec),
            ),
            compiler_params=pltpu.CompilerParams(
                dimension_semantics=("parallel", "arbitrary", "arbitrary"),
                vmem_limit_bytes=vmem_limit,
            ),
        )(x3d)

        # ----- pass 2: y = x * scale + shift (affine folded in-kernel) -----
        y3d = pl.pallas_call(
            functools.partial(_norm_kernel, inv_nhw=inv_nhw, eps=eps),
            out_shape=jax.ShapeDtypeStruct((N, C, HW), x.dtype),
            grid_spec=pltpu.PrefetchScalarGridSpec(
                num_scalar_prefetch=0,
                grid=grid,
                in_specs=[x_spec, vec_spec, vec_spec, vec_spec, vec_spec],
                out_specs=x_spec,
            ),
            compiler_params=pltpu.CompilerParams(
                dimension_semantics=("parallel", "parallel", "parallel"),
                vmem_limit_bytes=vmem_limit,
            ),
        )(x3d, sum_c, ssq_c, g2d, b2d)

        mean = sum_c.reshape(C) * jnp.float32(inv_nhw)
        var = jnp.maximum(ssq_c.reshape(C) * jnp.float32(inv_nhw) - mean * mean, 0.0)

    y = y3d.reshape(N, C, H, W)

    # Running-stat update mirrors the PyTorch module: biased var (correction=0),
    # scalar (1,) running buffers broadcast against per-channel stats -> (C,).
    new_running_mean = (1.0 - momentum) * running_mean + momentum * mean
    new_running_var = (1.0 - momentum) * running_var + momentum * var
    return y, new_running_mean, new_running_var


def batchnorm_reference(x, gamma, beta, eps=1e-5):
    x = x.astype(jnp.float32)
    mean = jnp.mean(x, axis=(0, 2, 3), keepdims=True)
    var = jnp.mean((x - mean) ** 2, axis=(0, 2, 3), keepdims=True)
    return gamma * (x - mean) * lax.rsqrt(var + eps) + beta


if __name__ == "__main__":
    key = jax.random.PRNGKey(0)
    N, C, H, W = 2, 4, 16, 16

    x = jax.random.normal(key, (N, C, H, W), dtype=jnp.float32) * 2.0 + 0.5

    # Deterministic parameter init, matching nn.Parameter(torch.ones/zeros(shape)).
    gamma = jnp.ones((1, C, 1, 1), dtype=jnp.float32)
    beta = jnp.zeros((1, C, 1, 1), dtype=jnp.float32)
    running_mean = jnp.zeros((1,), dtype=jnp.float32)
    running_var = jnp.ones((1,), dtype=jnp.float32)

    y_ref = batchnorm_reference(x, gamma, beta, eps=1e-5)

    # Fast path (whole x VMEM-resident, single pass).
    y1, rm1, rv1 = batchnorm_forward(x, gamma, beta, running_mean, running_var,
                                     eps=1e-5, momentum=0.1)
    # Tiled two-pass path (exercised explicitly at this small shape).
    y2, rm2, rv2 = batchnorm_forward(x, gamma, beta, running_mean, running_var,
                                     eps=1e-5, momentum=0.1, force_two_pass=True)
    jax.block_until_ready((y1, rm1, rv1, y2, rm2, rv2))

    for y, rm, rv in ((y1, rm1, rv1), (y2, rm2, rv2)):
        assert y.shape == x.shape and y.dtype == x.dtype
        assert float(jnp.max(jnp.abs(y - y_ref))) < 1e-4, "mismatch vs reference"
        assert rm.shape == (C,) and rv.shape == (C,)
    assert float(jnp.max(jnp.abs(y1 - y2))) < 1e-5, "fused vs two-pass mismatch"

    print("KERNEL_OK")
</pallas_src>

<mosaic_0001>
module attributes {stable_mosaic.version = 11 : i64} {
  func.func @_fused_kernel(%arg0: memref<2x4x256xf32, #tpu.memory_space<vmem>>, %arg1: memref<4x1xf32, #tpu.memory_space<vmem>>, %arg2: memref<4x1xf32, #tpu.memory_space<vmem>>, %arg3: memref<2x4x256xf32, #tpu.memory_space<vmem>>, %arg4: memref<4x1xf32, #tpu.memory_space<vmem>>, %arg5: memref<4x1xf32, #tpu.memory_space<vmem>>) attributes {dimension_semantics = [], scalar_prefetch = 0 : i64, scratch_operands = 0 : i64, tpu.core_type = #tpu.core_type<tc>} {
    %c0 = arith.constant 0 : index
    %c0_0 = arith.constant 0 : index
    %c0_1 = arith.constant 0 : index
    %0 = vector.load %arg0[%c0, %c0_0, %c0_1] : memref<2x4x256xf32, #tpu.memory_space<vmem>>, vector<2x4x256xf32>
    %cst = arith.constant dense<0.000000e+00> : vector<2x4xf32>
    %1 = vector.multi_reduction <add>, %0, %cst [2] : vector<2x4x256xf32> to vector<2x4xf32>
    %2 = vector.shape_cast %1 : vector<2x4xf32> to vector<2x4x1xf32>
    %cst_2 = arith.constant dense<0.000000e+00> : vector<4x1xf32>
    %3 = vector.multi_reduction <add>, %2, %cst_2 [0] : vector<2x4x1xf32> to vector<4x1xf32>
    %4 = vector.shape_cast %3 : vector<4x1xf32> to vector<1x4x1xf32>
    %5 = arith.mulf %0, %0 : vector<2x4x256xf32>
    %cst_3 = arith.constant dense<0.000000e+00> : vector<2x4xf32>
    %6 = vector.multi_reduction <add>, %5, %cst_3 [2] : vector<2x4x256xf32> to vector<2x4xf32>
    %7 = vector.shape_cast %6 : vector<2x4xf32> to vector<2x4x1xf32>
    %cst_4 = arith.constant dense<0.000000e+00> : vector<4x1xf32>
    %8 = vector.multi_reduction <add>, %7, %cst_4 [0] : vector<2x4x1xf32> to vector<4x1xf32>
    %9 = vector.shape_cast %8 : vector<4x1xf32> to vector<1x4x1xf32>
    %cst_5 = arith.constant 0.001953125 : f32
    %10 = vector.broadcast %cst_5 : f32 to vector<1x4x1xf32>
    %11 = arith.mulf %4, %10 : vector<1x4x1xf32>
    %cst_6 = arith.constant 0.001953125 : f32
    %12 = vector.broadcast %cst_6 : f32 to vector<1x4x1xf32>
    %13 = arith.mulf %9, %12 : vector<1x4x1xf32>
    %14 = arith.mulf %11, %11 : vector<1x4x1xf32>
    %15 = arith.subf %13, %14 : vector<1x4x1xf32>
    %cst_7 = arith.constant 0.000000e+00 : f32
    %16 = vector.broadcast %cst_7 : f32 to vector<1x4x1xf32>
    %17 = arith.maximumf %15, %16 : vector<1x4x1xf32>
    %cst_8 = arith.constant 9.99999974E-6 : f32
    %18 = vector.broadcast %cst_8 : f32 to vector<1x4x1xf32>
    %19 = arith.addf %17, %18 : vector<1x4x1xf32>
    %20 = math.rsqrt %19 : vector<1x4x1xf32>
    %c0_9 = arith.constant 0 : index
    %c0_10 = arith.constant 0 : index
    %21 = vector.load %arg1[%c0_9, %c0_10] : memref<4x1xf32, #tpu.memory_space<vmem>>, vector<4x1xf32>
    %22 = vector.shape_cast %21 : vector<4x1xf32> to vector<1x4x1xf32>
    %23 = arith.mulf %22, %20 : vector<1x4x1xf32>
    %c0_11 = arith.constant 0 : index
    %c0_12 = arith.constant 0 : index
    %24 = vector.load %arg2[%c0_11, %c0_12] : memref<4x1xf32, #tpu.memory_space<vmem>>, vector<4x1xf32>
    %25 = vector.shape_cast %24 : vector<4x1xf32> to vector<1x4x1xf32>
    %26 = arith.mulf %11, %23 : vector<1x4x1xf32>
    %27 = arith.subf %25, %26 : vector<1x4x1xf32>
    %28 = vector.broadcast %23 : vector<1x4x1xf32> to vector<2x4x256xf32>
    %29 = arith.mulf %0, %28 : vector<2x4x256xf32>
    %30 = vector.broadcast %27 : vector<1x4x1xf32> to vector<2x4x256xf32>
    %31 = arith.addf %29, %30 : vector<2x4x256xf32>
    %c0_13 = arith.constant 0 : index
    %c0_14 = arith.constant 0 : index
    %c0_15 = arith.constant 0 : index
    %32 = vector.load %arg3[%c0_13, %c0_14, %c0_15] : memref<2x4x256xf32, #tpu.memory_space<vmem>>, vector<2x4x256xf32>
    tpu.vector_store %arg3[%c0_13, %c0_14, %c0_15], %31 {strides = array<i32>} : memref<2x4x256xf32, #tpu.memory_space<vmem>>, vector<2x4x256xf32>,
    %33 = vector.shape_cast %11 : vector<1x4x1xf32> to vector<4x1xf32>
    %c0_16 = arith.constant 0 : index
    %c0_17 = arith.constant 0 : index
    %34 = vector.load %arg4[%c0_16, %c0_17] : memref<4x1xf32, #tpu.memory_space<vmem>>, vector<4x1xf32>
    tpu.vector_store %arg4[%c0_16, %c0_17], %33 {strides = array<i32>} : memref<4x1xf32, #tpu.memory_space<vmem>>, vector<4x1xf32>,
    %35 = vector.shape_cast %17 : vector<1x4x1xf32> to vector<4x1xf32>
    %c0_18 = arith.constant 0 : index
    %c0_19 = arith.constant 0 : index
    %36 = vector.load %arg5[%c0_18, %c0_19] : memref<4x1xf32, #tpu.memory_space<vmem>>, vector<4x1xf32>
    tpu.vector_store %arg5[%c0_18, %c0_19], %35 {strides = array<i32>} : memref<4x1xf32, #tpu.memory_space<vmem>>, vector<4x1xf32>,
    return
  }
}

</mosaic_0001>

<llo_original>
// kernel: tpu_custom_call.1
$region0: #{tpu_custom_call.1}
  #allocation0 [shape = 'u32[]', space=smem, size = 0x4, offset = 0x4, fixed_abs, tag = 'smem constant byte address 0x4 - core index']
  #allocation1 [shape = 'u32[72,128]{1,0:T(1,128)}', space=vmem, size = 0x9000, scoped, tag = 'internal scratch']
  %s0 = inlined_call_operand.hbm [shape: f32[2,4,256], index: 0, kind: input, shape index: {}]
  %s1 = inlined_call_operand.vmem [shape: f32[4,1], index: 1, kind: input, shape index: {}]
  %s2 = inlined_call_operand.vmem [shape: f32[4,1], index: 2, kind: input, shape index: {}]
  %s3 = inlined_call_operand.hbm [shape: f32[2,4,256], index: 3, kind: output, shape index: {0}]
  %s4 = inlined_call_operand.vmem [shape: f32[4,1], index: 4, kind: output, shape index: {1}]
  %s5 = inlined_call_operand.vmem [shape: f32[4,1], index: 5, kind: output, shape index: {2}]
  %6 = xla_tuple %s3, %s4, %s5
  %s7 = sld [smem:[#allocation0]]
  $region42: #{tpu_custom_call.1} parent=0
    _
  %s9 = ssub.s32 1, %s7
  %s10 = scalar_select 0, %s9, %s7
  $region1: #{tpu_custom_call.1} parent=0
    #allocation2 [shape = 'u8[8192]{0}', space=vmem, size = 0x2000, scoped, tag = 'input window, operand 0, single buffered']
    #allocation3 [shape = 's32[1]{0}', space=sflag, size = 0x4, scoped, tag = 'scoped memory for tpu_custom_call.1']
    #allocation4 [shape = 's32[1]{0}', space=sflag, size = 0x4, scoped, tag = 'scoped memory for tpu_custom_call.1']
    #allocation5 [shape = 'u8[8192]{0}', space=vmem, size = 0x2000, scoped, tag = 'output window, operand 0, single buffered']
    %11 = vsyncpa [#allocation3], 0
    %12 = vsyncpa [#allocation4], 0
    // Predicated region
    $region2: #{tpu_custom_call.1} parent=1 // pred_check
      _
    $region3: #{tpu_custom_call.1} parent=1 // pred_check_branch
      %14 = sbr.rel (0) target = $region5
    $region4: #{tpu_custom_call.1} parent=1 // pred_region
      %16 = vsyncadd [#allocation3], 0
      %s17 = sshll.u32 %s0, 4
      %s18 = int_to_ptr.hbm [resolvable:$true] %s17
      %s19 = sshll.u32 [#allocation2], 4
      %s20 = int_to_ptr.vmem [resolvable:$true] %s19
      %25 = dma.hbm_to_vmem [thread:$0]  %s18, 256, %s20, [#allocation3], 128, 128, 8
    $region5: #{tpu_custom_call.1} parent=1 // pred_fallthru
      _
    // Predicated region
    $region6: #{tpu_custom_call.1} parent=1 // pred_check
      _
    $region7: #{tpu_custom_call.1} parent=1 // pred_check_branch
      %27 = sbr.rel (0) target = $region9
    $region8: #{tpu_custom_call.1} parent=1 // pred_region
      _
    $region9: #{tpu_custom_call.1} parent=1 // pred_fallthru
      _
    // Predicated region
    $region10: #{tpu_custom_call.1} parent=1 // pred_check
      _
    $region11: #{tpu_custom_call.1} parent=1 // pred_check_branch
      %29 = sbr.rel (0) target = $region13
    $region12: #{tpu_custom_call.1} parent=1 // pred_region
      _
    $region13: #{tpu_custom_call.1} parent=1 // pred_fallthru
      _
    // Predicated region
    $region14: #{tpu_custom_call.1} parent=1 // pred_check
      _
    $region15: #{tpu_custom_call.1} parent=1 // pred_check_branch
      %31 = sbr.rel (0) target = $region17
    $region16: #{tpu_custom_call.1} parent=1 // pred_region
      %33 = dma.done [#allocation3], 256
    $region17: #{tpu_custom_call.1} parent=1 // pred_fallthru
      _
    %v34 = vld [vmem:[#allocation2] sm:$0xff]
    %v35 = vld [vmem:[#allocation2 + $0x8] sm:$0xff]
    %38 = vst [vmem:[#allocation1] ss:$2 sm:$0xff] %v34
    %v39 = vld.sshfl [vmem:[#allocation1] sm:$0xff pattern:$0x75316420]
    %v40 = vld.sshfl [vmem:[#allocation1 + $0x8] sm:$0xff pattern:$0x75316420]
    %s41 = scalar_lea.vmem [#allocation1], 16
    %42 = vst [vmem:[%s41] ss:$2 sm:$0xff] %v35
    %v43 = vld.sshfl [vmem:[#allocation1 + $0x10] sm:$0xff pattern:$0x75316420]
    %v44 = vld.sshfl [vmem:[#allocation1 + $0x18] sm:$0xff pattern:$0x75316420]
    %vm49 = vcmask 1043456
    %v50 = vsel %vm49, %v39, 0.0
    %v51 = vsel %vm49, %v40, 0.0
    %v52 = vadd.f32 %v50, %v51
    %53 = vadd.xlane.f32.xlu0 %v52
    %v54 = vpop.xlane.xlu0 %53
    %v55 = vsel %vm49, %v43, 0.0
    %v56 = vsel %vm49, %v44, 0.0
    %v57 = vadd.f32 %v55, %v56
    %58 = vadd.xlane.f32.xlu0 %v57
    %v59 = vpop.xlane.xlu0 %58
    %v60 = vsel %vm49, %v54, 0.0
    %v61 = vsel %vm49, %v59, 0.0
    %v62 = vadd.f32 %v60, %v61
    %v63 = vmul.f32 %v34, %v34
    %v64 = vmul.f32 %v35, %v35
    %67 = vst [vmem:[#allocation1] ss:$2 sm:$0xff] %v63
    %v68 = vld.sshfl [vmem:[#allocation1] sm:$0xff pattern:$0x75316420]
    %v69 = vld.sshfl [vmem:[#allocation1 + $0x8] sm:$0xff pattern:$0x75316420]
    %s70 = scalar_lea.vmem [#allocation1], 16
    %71 = vst [vmem:[%s70] ss:$2 sm:$0xff] %v64
    %v72 = vld.sshfl [vmem:[#allocation1 + $0x10] sm:$0xff pattern:$0x75316420]
    %v73 = vld.sshfl [vmem:[#allocation1 + $0x18] sm:$0xff pattern:$0x75316420]
    %v78 = vsel %vm49, %v68, 0.0
    %v79 = vsel %vm49, %v69, 0.0
    %v80 = vadd.f32 %v78, %v79
    %81 = vadd.xlane.f32.xlu0 %v80
    %v82 = vpop.xlane.xlu0 %81
    %v83 = vsel %vm49, %v72, 0.0
    %v84 = vsel %vm49, %v73, 0.0
    %v85 = vadd.f32 %v83, %v84
    %86 = vadd.xlane.f32.xlu0 %v85
    %v87 = vpop.xlane.xlu0 %86
    %v88 = vsel %vm49, %v82, 0.0
    %v89 = vsel %vm49, %v87, 0.0
    %v90 = vadd.f32 %v88, %v89
    %v91 = vmul.f32 %v62, 0.001953125
    %v92 = vmul.f32 %v90, 0.001953125
    %v93 = vmul.f32 %v91, %v91
    %v94 = vsub.f32 %v92, %v93
    %v95 = vmax.f32 %v94, 0.0
    %v96 = vadd.f32 %v95, 1e-05
    %v97 = vrsqrt.pop %v96
    %v98 = vmul.f32 %v97, %v96
    %v99 = vmul.f32 %v98, %v97
    %v100 = vmul.f32 0.5, %v99
    %v101 = vsub.f32 1.5, %v100
    %v102 = vmul.f32 %v97, %v101
    %vm103 = vweird.f32 %v96
    %vm104 = vweird.f32 %v97
    %vm105 = vmor %vm103, %vm104
    %v106 = vsel %vm105, %v97, %v102
    %v107 = vld [vmem:[%s1] sm:$0xf]
    %v108 = vmul.f32 %v107, %v106
    %v109 = vld [vmem:[%s2] sm:$0xf]
    %v110 = vmul.f32 %v91, %v108
    %v111 = vsub.f32 %v109, %v110
    %113 = vset.pattern.permute.xlu0 0
    %114 = vperm.xlu0 %113, %v108
    %v115 = vpop.permute.xlu0 %114
    %v117 = vunpack.c.l.s4 839922192
    %v118 = vunpack.c.0.s8 %v117
    %v119 = vperm.slane %v115, %v118
    %v121 = vmul.f32 %v34, %v119
    %v122 = vmul.f32 %v35, %v119
    %124 = vset.pattern.permute.xlu0 0
    %125 = vperm.xlu0 %124, %v111
    %v126 = vpop.permute.xlu0 %125
    %v128 = vunpack.c.l.s4 839922192
    %v129 = vunpack.c.0.s8 %v128
    %v130 = vperm.slane %v126, %v129
    %v132 = vadd.f32 %v121, %v130
    %v133 = vadd.f32 %v122, %v130
    %134 = vst [vmem:[#allocation5] sm:$0xff] %v132
    %135 = vst [vmem:[#allocation5 + $0x8] sm:$0xff] %v133
    %vm136 = vcmask 3072
    %137 = vst.msk [vmem:[%s4] sm:$0xf] %vm136, %v91
    %138 = vst.msk [vmem:[%s5] sm:$0xf] %vm136, %v95
    // Predicated region
    $region18: #{tpu_custom_call.1} parent=1 // pred_check
      _
    $region19: #{tpu_custom_call.1} parent=1 // pred_check_branch
      %140 = sbr.rel (0) target = $region21
    $region20: #{tpu_custom_call.1} parent=1 // pred_region
      %142 = vsyncadd [#allocation4], 0
      %s143 = sshll.u32 [#allocation5], 4
      %s144 = int_to_ptr.vmem [resolvable:$true] %s143
      %s145 = sshll.u32 %s3, 4
      %s146 = int_to_ptr.hbm [resolvable:$true] %s145
      %151 = dma.vmem_to_hbm [thread:$0]  %s144, 256, %s146, [#allocation4], 128, 128, 8
    $region21: #{tpu_custom_call.1} parent=1 // pred_fallthru
      _
    // Predicated region
    $region22: #{tpu_custom_call.1} parent=1 // pred_check
      _
    $region23: #{tpu_custom_call.1} parent=1 // pred_check_branch
      %153 = sbr.rel (0) target = $region25
    $region24: #{tpu_custom_call.1} parent=1 // pred_region
      _
    $region25: #{tpu_custom_call.1} parent=1 // pred_fallthru
      _
    // Predicated region
    $region26: #{tpu_custom_call.1} parent=1 // pred_check
      _
    $region27: #{tpu_custom_call.1} parent=1 // pred_check_branch
      %155 = sbr.rel (0) target = $region29
    $region28: #{tpu_custom_call.1} parent=1 // pred_region
      _
    $region29: #{tpu_custom_call.1} parent=1 // pred_fallthru
      _
    // Predicated region
    $region30: #{tpu_custom_call.1} parent=1 // pred_check
      _
    $region31: #{tpu_custom_call.1} parent=1 // pred_check_branch
      %157 = sbr.rel (0) target = $region33
    $region32: #{tpu_custom_call.1} parent=1 // pred_region
      %159 = dma.done [#allocation4], 256
    $region33: #{tpu_custom_call.1} parent=1 // pred_fallthru
      _
    // Predicated region
    $region34: #{tpu_custom_call.1} parent=1 // pred_check
      _
    $region35: #{tpu_custom_call.1} parent=1 // pred_check_branch
      %161 = sbr.rel (0) target = $region37
    $region36: #{tpu_custom_call.1} parent=1 // pred_region
      _
    $region37: #{tpu_custom_call.1} parent=1 // pred_fallthru
      _
    // Predicated region
    $region38: #{tpu_custom_call.1} parent=1 // pred_check
      _
    $region39: #{tpu_custom_call.1} parent=1 // pred_check_branch
      %163 = sbr.rel (0) target = $region41
    $region40: #{tpu_custom_call.1} parent=1 // pred_region
      _
    $region41: #{tpu_custom_call.1} parent=1 // pred_fallthru
      _
    %164 = vsyncpa [#allocation3], 1
    %165 = vsyncpa [#allocation4], 1

</llo_original>
